<compile_context>
chip_gen: v7x
topology: tpu7x:2x2x1
jax: 0.10.0
libtpu: 0.0.40
codegen_flags: <defaults>
</compile_context>

<pallas_src>
import functools

import jax
import jax.numpy as jnp
from jax.experimental import pallas as pl
from jax.experimental.pallas import tpu as pltpu


def _round_up(x, m):
    return (x + m - 1) // m * m


def highway_kernel(x_ref, w_ref, b_ref, out_ref, *, mxu_precision):
    """One batch tile of rows, all highway layers applied in sequence.

    x_ref:   [TM, S_pad]          compute dtype (bf16 or f32)
    w_ref:   [L, S_pad, 3*S_pad]  compute dtype, packed [gate | nonlinear | linear]
    b_ref:   [L, 1, 3*S_pad]      f32, packed the same way
    out_ref: [TM, S_pad]          output dtype
    """
    num_layers, s_pad, _ = w_ref.shape
    x = x_ref[...]
    for layer in range(num_layers):  # static trip count -> fully unrolled
        # One fused MXU pass per layer producing [TM, 3*S_pad] in f32.
        y = jnp.dot(x, w_ref[layer], preferred_element_type=jnp.float32,
                    precision=mxu_precision) + b_ref[layer]
        g = y[:, 0:s_pad]                  # lane-aligned static slices
        n = y[:, s_pad:2 * s_pad]
        q = y[:, 2 * s_pad:3 * s_pad]
        gate = 0.5 * (jnp.tanh(0.5 * g) + 1.0)          # sigmoid via EUP tanh
        h = q + gate * (jnp.maximum(n, 0.0) - q)        # gate*relu(n)+(1-gate)*q
        # Cast back to the MXU compute dtype only if another layer consumes it.
        x = h.astype(x_ref.dtype) if layer + 1 < num_layers else h
    out_ref[...] = x.astype(out_ref.dtype)


def prepare_highway_params(wg, bg, wn, bn, wl, bl, *, compute_dtype=jnp.bfloat16):
    """Pad the feature dim to a multiple of 128, pack the three per-layer
    Linear layers into one wide weight/bias, and cast once (static across calls).

    wg/wn/wl: [L, S, S] in (in_features, out_features) layout
    bg/bn/bl: [L, 1, S]
    Returns (w_cat [L, S_pad, 3*S_pad] compute dtype, b_cat [L, 1, 3*S_pad] f32).
    """
    L, S, _ = wg.shape
    S_pad = _round_up(S, 128)

    def pad_w(w):
        return jnp.pad(w, ((0, 0), (0, S_pad - S), (0, S_pad - S)))

    def pad_b(b):
        return jnp.pad(b, ((0, 0), (0, 0), (0, S_pad - S)))

    # Packed column order must match the kernel's g / n / q slices.
    w_cat = jnp.concatenate([pad_w(wg), pad_w(wn), pad_w(wl)], axis=-1)
    b_cat = jnp.concatenate([pad_b(bg), pad_b(bn), pad_b(bl)], axis=-1)
    return w_cat.astype(compute_dtype), b_cat.astype(jnp.float32)


def highway_forward(x, w_cat, b_cat, *, out_dtype=jnp.float32,
                    block_rows=256, vmem_limit_bytes=None):
    """Highway forward.

    x:     [B, S]                 input activations (any float dtype)
    w_cat: [L, S_pad, 3*S_pad]    packed weights from prepare_highway_params
    b_cat: [L, 1, 3*S_pad]        packed biases (f32)
    Returns [B, S] in out_dtype.
    """
    B, S = x.shape
    L, S_pad, S3 = w_cat.shape
    cdt = jnp.dtype(w_cat.dtype)
    out_dt = jnp.dtype(out_dtype)

    # --- row tiling: sublane-aligned batch tiles, grid of at least 2 --------
    sublane = 16 if cdt == jnp.bfloat16 else 8
    tm_target = max(sublane, min(block_rows, pl.cdiv(B, 2)))
    TM = _round_up(tm_target, sublane)
    B_pad = _round_up(B, TM)
    grid = (B_pad // TM,)

    xp = jnp.pad(x, ((0, B_pad - B), (0, S_pad - S))).astype(cdt)

    # --- VMEM budget: weights/biases resident (single-buffered) + 2x row tiles
    resident_bytes = (L * S_pad * S3 * cdt.itemsize          # packed weights
                      + L * 1 * S3 * 4                       # packed biases (f32)
                      + 2 * TM * S_pad * cdt.itemsize        # double-buffered x tiles
                      + 2 * TM * S_pad * out_dt.itemsize)    # double-buffered out tiles
    if vmem_limit_bytes is None:
        vmem_limit_bytes = min(56 * 1024 * 1024,
                               max(32 * 1024 * 1024, 2 * resident_bytes + (4 << 20)))

    row_spec = pl.BlockSpec((TM, S_pad), lambda i: (i, 0))
    # Constant index_map -> fetched once; single-buffer to halve resident VMEM.
    w_spec = pl.BlockSpec((L, S_pad, S3), lambda i: (0, 0, 0),
                          pipeline_mode=pl.Buffered(buffer_count=1))
    b_spec = pl.BlockSpec((L, 1, S3), lambda i: (0, 0, 0),
                          pipeline_mode=pl.Buffered(buffer_count=1))

    mxu_precision = (jax.lax.Precision.HIGHEST
                     if cdt == jnp.float32 else None)

    cost = pl.CostEstimate(
        flops=2 * B_pad * S_pad * S3 * L,
        transcendentals=B_pad * S_pad * L,
        bytes_accessed=(xp.size * cdt.itemsize
                        + L * S_pad * S3 * cdt.itemsize
                        + L * S3 * 4
                        + B_pad * S_pad * out_dt.itemsize),
    )

    out_padded = pl.pallas_call(
        functools.partial(highway_kernel, mxu_precision=mxu_precision),
        out_shape=jax.ShapeDtypeStruct((B_pad, S_pad), out_dt),
        grid=grid,
        in_specs=[row_spec, w_spec, b_spec],
        out_specs=row_spec,
        compiler_params=pltpu.CompilerParams(
            dimension_semantics=("parallel",),   # megacore sharding on v7x
            vmem_limit_bytes=vmem_limit_bytes,
        ),
        cost_estimate=cost,
    )(xp, w_cat, b_cat)

    return out_padded[:B, :S]


def highway_reference(x, wg, bg, wn, bn, wl, bl):
    """Pure-JAX reference matching the PyTorch Highway.forward."""
    hp = jax.lax.Precision.HIGHEST
    for layer in range(wg.shape[0]):
        g = jax.nn.sigmoid(jnp.dot(x, wg[layer], precision=hp) + bg[layer, 0])
        n = jnp.maximum(jnp.dot(x, wn[layer], precision=hp) + bn[layer, 0], 0.0)
        q = jnp.dot(x, wl[layer], precision=hp) + bl[layer, 0]
        x = g * n + (1.0 - g) * q
    return x


if __name__ == "__main__":
    # Small shapes consistent with Highway(size, num_layers) acting on [batch, size].
    batch, size, num_layers = 40, 64, 2

    key = jax.random.PRNGKey(0)
    keys = jax.random.split(key, 1 + 6 * num_layers)
    x = jax.random.normal(keys[0], (batch, size), dtype=jnp.float32)

    # PyTorch nn.Linear default init: U(-1/sqrt(in), 1/sqrt(in)) for W and b.
    bound = 1.0 / jnp.sqrt(size)

    def linear_params(kw, kb):
        # generated in (in_features, out_features) layout so the kernel does x @ W
        w = jax.random.uniform(kw, (size, size), jnp.float32, -bound, bound)
        b = jax.random.uniform(kb, (1, size), jnp.float32, -bound, bound)
        return w, b

    wg_l, bg_l, wn_l, bn_l, wl_l, bl_l = [], [], [], [], [], []
    for layer in range(num_layers):
        k = keys[1 + 6 * layer: 1 + 6 * (layer + 1)]
        w, b = linear_params(k[0], k[1]); wg_l.append(w); bg_l.append(b)
        w, b = linear_params(k[2], k[3]); wn_l.append(w); bn_l.append(b)
        w, b = linear_params(k[4], k[5]); wl_l.append(w); bl_l.append(b)

    wg = jnp.stack(wg_l); bg = jnp.stack(bg_l)
    wn = jnp.stack(wn_l); bn = jnp.stack(bn_l)
    wl = jnp.stack(wl_l); bl = jnp.stack(bl_l)

    ref = highway_reference(x, wg, bg, wn, bn, wl, bl)

    # Default bf16 MXU-input path (f32 accumulation / gate math inside the kernel).
    w_cat_bf16, b_cat = prepare_highway_params(wg, bg, wn, bn, wl, bl,
                                               compute_dtype=jnp.bfloat16)
    out_bf16 = highway_forward(x, w_cat_bf16, b_cat)
    out_bf16 = jax.block_until_ready(out_bf16)
    assert out_bf16.shape == (batch, size)
    assert jnp.allclose(out_bf16, ref, atol=5e-2, rtol=5e-2), "bf16 mismatch vs reference"

    # f32 "exact" path (HIGHEST matmul precision, tight tolerance).
    w_cat_f32, b_cat_f32 = prepare_highway_params(wg, bg, wn, bn, wl, bl,
                                                  compute_dtype=jnp.float32)
    out_f32 = highway_forward(x, w_cat_f32, b_cat_f32, block_rows=16)
    out_f32 = jax.block_until_ready(out_f32)
    assert out_f32.shape == (batch, size)
    assert jnp.allclose(out_f32, ref, atol=1e-4, rtol=1e-4), "f32 mismatch vs reference"

    print("KERNEL_OK")
</pallas_src>

<mosaic_0001>
module attributes {stable_mosaic.version = 11 : i64} {
  func.func @highway_kernel(%arg0: i32, %arg1: memref<32x128xbf16, #tpu.memory_space<vmem>>, %arg2: memref<2x128x384xbf16, #tpu.memory_space<vmem>>, %arg3: memref<2x1x384xf32, #tpu.memory_space<vmem>>, %arg4: memref<32x128xf32, #tpu.memory_space<vmem>>) attributes {dimension_semantics = [#tpu.dimension_semantics<parallel>], iteration_bounds = array<i64: 2>, scalar_prefetch = 0 : i64, scratch_operands = 0 : i64, tpu.core_type = #tpu.core_type<tc>, window_params = [{transform_indices = @transform_0, window_bounds = array<i64: 32, 128>}, {pipeline_mode = #tpu.pipeline_mode<synchronous>, transform_indices = @transform_1, window_bounds = array<i64: 2, 128, 384>}, {pipeline_mode = #tpu.pipeline_mode<synchronous>, transform_indices = @transform_2, window_bounds = array<i64: 2, 1, 384>}, {transform_indices = @transform_3, window_bounds = array<i64: 32, 128>}]} {
    %c0 = arith.constant 0 : index
    %c0_0 = arith.constant 0 : index
    %0 = vector.load %arg1[%c0, %c0_0] : memref<32x128xbf16, #tpu.memory_space<vmem>>, vector<32x128xbf16>
    %c0_1 = arith.constant 0 : index
    %c0_2 = arith.constant 0 : index
    %c0_3 = arith.constant 0 : index
    %1 = vector.load %arg2[%c0_1, %c0_2, %c0_3] : memref<2x128x384xbf16, #tpu.memory_space<vmem>>, vector<1x128x384xbf16>
    %2 = vector.shape_cast %1 : vector<1x128x384xbf16> to vector<128x384xbf16>
    %cst = arith.constant dense<0.000000e+00> : vector<32x384xf32>
    %3 = tpu.matmul %0, %2, %cst {dimension_numbers = #tpu.dot_dimension_numbers<[1], [0], [0], [1], [0, 0, 1, 1], [], []>} : vector<32x128xbf16>, vector<128x384xbf16>, vector<32x384xf32> -> vector<32x384xf32>
    %c0_4 = arith.constant 0 : index
    %c0_5 = arith.constant 0 : index
    %c0_6 = arith.constant 0 : index
    %4 = vector.load %arg3[%c0_4, %c0_5, %c0_6] : memref<2x1x384xf32, #tpu.memory_space<vmem>>, vector<1x1x384xf32>
    %5 = vector.shape_cast %4 : vector<1x1x384xf32> to vector<1x384xf32>
    %6 = vector.broadcast %5 : vector<1x384xf32> to vector<32x384xf32>
    %7 = arith.addf %3, %6 : vector<32x384xf32>
    %8 = vector.extract_strided_slice %7 {offsets = [0, 0], sizes = [32, 128], strides = [1, 1]} : vector<32x384xf32> to vector<32x128xf32>
    %9 = vector.extract_strided_slice %7 {offsets = [0, 128], sizes = [32, 128], strides = [1, 1]} : vector<32x384xf32> to vector<32x128xf32>
    %10 = vector.extract_strided_slice %7 {offsets = [0, 256], sizes = [32, 128], strides = [1, 1]} : vector<32x384xf32> to vector<32x128xf32>
    %cst_7 = arith.constant 5.000000e-01 : f32
    %11 = vector.broadcast %cst_7 : f32 to vector<32x128xf32>
    %12 = arith.mulf %11, %8 : vector<32x128xf32>
    %13 = math.tanh %12 : vector<32x128xf32>
    %cst_8 = arith.constant 1.000000e+00 : f32
    %14 = vector.broadcast %cst_8 : f32 to vector<32x128xf32>
    %15 = arith.addf %13, %14 : vector<32x128xf32>
    %cst_9 = arith.constant 5.000000e-01 : f32
    %16 = vector.broadcast %cst_9 : f32 to vector<32x128xf32>
    %17 = arith.mulf %16, %15 : vector<32x128xf32>
    %cst_10 = arith.constant 0.000000e+00 : f32
    %18 = vector.broadcast %cst_10 : f32 to vector<32x128xf32>
    %19 = arith.maximumf %9, %18 : vector<32x128xf32>
    %20 = arith.subf %19, %10 : vector<32x128xf32>
    %21 = arith.mulf %17, %20 : vector<32x128xf32>
    %22 = arith.addf %10, %21 : vector<32x128xf32>
    %23 = arith.truncf %22 : vector<32x128xf32> to vector<32x128xbf16>
    %c1 = arith.constant 1 : index
    %c0_11 = arith.constant 0 : index
    %c0_12 = arith.constant 0 : index
    %24 = vector.load %arg2[%c1, %c0_11, %c0_12] : memref<2x128x384xbf16, #tpu.memory_space<vmem>>, vector<1x128x384xbf16>
    %25 = vector.shape_cast %24 : vector<1x128x384xbf16> to vector<128x384xbf16>
    %cst_13 = arith.constant dense<0.000000e+00> : vector<32x384xf32>
    %26 = tpu.matmul %23, %25, %cst_13 {dimension_numbers = #tpu.dot_dimension_numbers<[1], [0], [0], [1], [0, 0, 1, 1], [], []>} : vector<32x128xbf16>, vector<128x384xbf16>, vector<32x384xf32> -> vector<32x384xf32>
    %c1_14 = arith.constant 1 : index
    %c0_15 = arith.constant 0 : index
    %c0_16 = arith.constant 0 : index
    %27 = vector.load %arg3[%c1_14, %c0_15, %c0_16] : memref<2x1x384xf32, #tpu.memory_space<vmem>>, vector<1x1x384xf32>
    %28 = vector.shape_cast %27 : vector<1x1x384xf32> to vector<1x384xf32>
    %29 = vector.broadcast %28 : vector<1x384xf32> to vector<32x384xf32>
    %30 = arith.addf %26, %29 : vector<32x384xf32>
    %31 = vector.extract_strided_slice %30 {offsets = [0, 0], sizes = [32, 128], strides = [1, 1]} : vector<32x384xf32> to vector<32x128xf32>
    %32 = vector.extract_strided_slice %30 {offsets = [0, 128], sizes = [32, 128], strides = [1, 1]} : vector<32x384xf32> to vector<32x128xf32>
    %33 = vector.extract_strided_slice %30 {offsets = [0, 256], sizes = [32, 128], strides = [1, 1]} : vector<32x384xf32> to vector<32x128xf32>
    %cst_17 = arith.constant 5.000000e-01 : f32
    %34 = vector.broadcast %cst_17 : f32 to vector<32x128xf32>
    %35 = arith.mulf %34, %31 : vector<32x128xf32>
    %36 = math.tanh %35 : vector<32x128xf32>
    %cst_18 = arith.constant 1.000000e+00 : f32
    %37 = vector.broadcast %cst_18 : f32 to vector<32x128xf32>
    %38 = arith.addf %36, %37 : vector<32x128xf32>
    %cst_19 = arith.constant 5.000000e-01 : f32
    %39 = vector.broadcast %cst_19 : f32 to vector<32x128xf32>
    %40 = arith.mulf %39, %38 : vector<32x128xf32>
    %cst_20 = arith.constant 0.000000e+00 : f32
    %41 = vector.broadcast %cst_20 : f32 to vector<32x128xf32>
    %42 = arith.maximumf %32, %41 : vector<32x128xf32>
    %43 = arith.subf %42, %33 : vector<32x128xf32>
    %44 = arith.mulf %40, %43 : vector<32x128xf32>
    %45 = arith.addf %33, %44 : vector<32x128xf32>
    %c0_21 = arith.constant 0 : index
    %c0_22 = arith.constant 0 : index
    %46 = vector.load %arg4[%c0_21, %c0_22] : memref<32x128xf32, #tpu.memory_space<vmem>>, vector<32x128xf32>
    tpu.vector_store %arg4[%c0_21, %c0_22], %45 {strides = array<i32>} : memref<32x128xf32, #tpu.memory_space<vmem>>, vector<32x128xf32>,
    return
  }
  func.func @transform_0(%arg0: i32) -> (i32, i32) {
    %c0_i32 = arith.constant 0 : i32
    %c0_i32_0 = arith.constant 0 : i32
    return %arg0, %c0_i32 : i32, i32
  }
  func.func @transform_1(%arg0: i32) -> (i32, i32, i32) {
    %c0_i32 = arith.constant 0 : i32
    %c0_i32_0 = arith.constant 0 : i32
    %c0_i32_1 = arith.constant 0 : i32
    %c0_i32_2 = arith.constant 0 : i32
    return %c0_i32, %c0_i32_0, %c0_i32_1 : i32, i32, i32
  }
  func.func @transform_2(%arg0: i32) -> (i32, i32, i32) {
    %c0_i32 = arith.constant 0 : i32
    %c0_i32_0 = arith.constant 0 : i32
    %c0_i32_1 = arith.constant 0 : i32
    %c0_i32_2 = arith.constant 0 : i32
    return %c0_i32, %c0_i32_0, %c0_i32_1 : i32, i32, i32
  }
  func.func @transform_3(%arg0: i32) -> (i32, i32) {
    %c0_i32 = arith.constant 0 : i32
    %c0_i32_0 = arith.constant 0 : i32
    return %arg0, %c0_i32 : i32, i32
  }
}

</mosaic_0001>

<llo_original>
// kernel: tpu_custom_call.1
$region0: #{tpu_custom_call.1}
  #allocation0 [shape = 'u32[]', space=smem, size = 0x4, offset = 0x4, fixed_abs, tag = 'smem constant byte address 0x4 - core index']
  #allocation1 [shape = 'u32[144,128]{1,0:T(1,128)}', space=vmem, size = 0x12000, scoped, tag = 'internal scratch']
  %s0 = inlined_call_operand.hbm [shape: bf16[64,128], index: 0, kind: input, shape index: {}]
  %s1 = inlined_call_operand.hbm [shape: bf16[2,128,384], index: 1, kind: input, shape index: {}]
  %s2 = inlined_call_operand.vmem [shape: f32[2,1,384], index: 2, kind: input, shape index: {}]
  %s3 = inlined_call_operand.hbm [shape: f32[64,128], index: 3, kind: output, shape index: {}]
  %s4 = sld [smem:[#allocation0]]
  $region53: #{tpu_custom_call.1} parent=0
    _
  %s6 = ssub.s32 1, %s4
  %s7 = scalar_select 0, %s6, %s4
  $region1: #{tpu_custom_call.1} parent=0
    #allocation2 [shape = 'u8[16384]{0}', space=vmem, size = 0x4000, scoped, tag = 'input window, operand 0']
    #allocation3 [shape = 's32[2]{0}', space=sflag, size = 0x8, scoped, tag = 'scoped memory for tpu_custom_call.1']
    #allocation4 [shape = 's32[2]{0}', space=sflag, size = 0x8, scoped, tag = 'scoped memory for tpu_custom_call.1']
    #allocation5 [shape = 'u8[196608]{0}', space=vmem, size = 0x30000, scoped, tag = 'input window, operand 1, single buffered']
    #allocation6 [shape = 's32[1]{0}', space=sflag, size = 0x4, scoped, tag = 'scoped memory for tpu_custom_call.1']
    #allocation7 [shape = 'u8[32768]{0}', space=vmem, size = 0x8000, scoped, tag = 'output window, operand 0']
    %8 = vsyncpa [#allocation3], 0
    %s9 = scalar_lea.sflag [#allocation3], 1
    %10 = vsyncpa %s9, 0
    %11 = vsyncpa [#allocation6], 0
    %12 = vsyncpa [#allocation4], 0
    %s13 = scalar_lea.sflag [#allocation4], 1
    %14 = vsyncpa %s13, 0
    loop: start=0, step=1, limit=4
    $region2: #{tpu_custom_call.1} parent=1 // loop_pre_header
      _
    $region3: #{tpu_custom_call.1} parent=1 // loop_header
      %s16 = sphi 0, %s20
      %p17 = scmp.ge.s32.totalorder %s16, 4
      %s26 = sphi 0, %s28
      %s29 = sphi 0, %s26
      %s30 = sphi 0, %s29
      %s46 = sphi 0, %s30
      %s50 = sphi 0, %s50
      %s52 = sphi 0, %s50
      %s53 = sphi 0, %s52
      %s67 = sphi 0, %s53
      %s71 = sphi 0, %s71
      %s73 = sphi 0, %s71
      %s74 = sphi 0, %s73
      %s88 = sphi 0, %s74
      %s94 = sphi 0, %s96
      %s97 = sphi 0, %s94
      %s98 = sphi 0, %s97
      %s114 = sphi 0, %s98
    $region4: #{tpu_custom_call.1} parent=1 // loop_header_branch
      %19 = sbr.rel (%p17) target = $region8
    $region5: #{tpu_custom_call.1} parent=1 // loop_body
      %s21 = ssub.s32 %s16, 1
      %s22 = ssub.s32 %s16, 2
      %s23 = sadd.s32 %s16, 1
      %s24 = ssub.s32 %s16, %s23
      %p25 = scmp.eq.s32.totalorder %s24, 0
      %s27 = sadd.s32 %s26, 1
      %s28 = scalar_select %p25, %s26, %s27
      %p31 = pneg %p25
      %p32 = scmp.eq.s32.totalorder %s16, 1
      %p33 = por %p31, %p32
      %p34 = scmp.ne.s32.totalorder %s26, %s29
      %p35 = scmp.eq.s32.totalorder %s16, 0
      %p36 = por %p34, %p35
      %p37 = scmp.ne.s32.totalorder %s26, %s29
      %p38 = scmp.eq.s32.totalorder %s21, 1
      %p39 = por %p37, %p38
      %p40 = scmp.ne.s32.totalorder %s29, %s30
      %p41 = scmp.eq.s32.totalorder %s21, 0
      %p42 = por %p40, %p41
      %p43 = scmp.ne.s32.totalorder %s29, %s30
      %p44 = scmp.eq.s32.totalorder %s22, 1
      %p45 = por %p43, %p44
      %p47 = scmp.ne.s32.totalorder %s30, %s46
      %p48 = scmp.eq.s32.totalorder %s22, 0
      %p49 = por %p47, %p48
      %s51 = sadd.s32 %s50, 1
      %p54 = scmp.eq.s32.totalorder %s16, 1
      %p55 = scmp.ne.s32.totalorder %s50, %s52
      %p56 = scmp.eq.s32.totalorder %s16, 0
      %p57 = por %p55, %p56
      %p58 = scmp.ne.s32.totalorder %s50, %s52
      %p59 = scmp.eq.s32.totalorder %s21, 1
      %p60 = por %p58, %p59
      %p61 = scmp.ne.s32.totalorder %s52, %s53
      %p62 = scmp.eq.s32.totalorder %s21, 0
      %p63 = por %p61, %p62
      %p64 = scmp.ne.s32.totalorder %s52, %s53
      %p65 = scmp.eq.s32.totalorder %s22, 1
      %p66 = por %p64, %p65
      %p68 = scmp.ne.s32.totalorder %s53, %s67
      %p69 = scmp.eq.s32.totalorder %s22, 0
      %p70 = por %p68, %p69
      %s72 = sadd.s32 %s71, 1
      %p75 = scmp.eq.s32.totalorder %s16, 1
      %p76 = scmp.ne.s32.totalorder %s71, %s73
      %p77 = scmp.eq.s32.totalorder %s16, 0
      %p78 = por %p76, %p77
      %p79 = scmp.ne.s32.totalorder %s71, %s73
      %p80 = scmp.eq.s32.totalorder %s21, 1
      %p81 = por %p79, %p80
      %p82 = scmp.ne.s32.totalorder %s73, %s74
      %p83 = scmp.eq.s32.totalorder %s21, 0
      %p84 = por %p82, %p83
      %p85 = scmp.ne.s32.totalorder %s73, %s74
      %p86 = scmp.eq.s32.totalorder %s22, 1
      %p87 = por %p85, %p86
      %p89 = scmp.ne.s32.totalorder %s74, %s88
      %p90 = scmp.eq.s32.totalorder %s22, 0
      %p91 = por %p89, %p90
      %s92 = ssub.s32 %s16, %s23
      %p93 = scmp.eq.s32.totalorder %s92, 0
      %s95 = sadd.s32 %s94, 1
      %s96 = scalar_select %p93, %s94, %s95
      %p99 = pneg %p93
      %p100 = scmp.eq.s32.totalorder %s16, 1
      %p101 = por %p99, %p100
      %p102 = scmp.ne.s32.totalorder %s94, %s97
      %p103 = scmp.eq.s32.totalorder %s16, 0
      %p104 = por %p102, %p103
      %p105 = scmp.ne.s32.totalorder %s94, %s97
      %p106 = scmp.eq.s32.totalorder %s21, 1
      %p107 = por %p105, %p106
      %p108 = scmp.ne.s32.totalorder %s97, %s98
      %p109 = scmp.eq.s32.totalorder %s21, 0
      %p110 = por %p108, %p109
      %p111 = scmp.ne.s32.totalorder %s97, %s98
      %p112 = scmp.eq.s32.totalorder %s22, 1
      %p113 = por %p111, %p112
      %p115 = scmp.ne.s32.totalorder %s98, %s114
      %p116 = scmp.eq.s32.totalorder %s22, 0
      %p117 = por %p115, %p116
      %p118 = scmp.le.s32.totalorder 1, %s16
      %p119 = scmp.lt.s32.totalorder %s16, 3
      %p120 = pnand %p118, %p119
      %p121 = pneg %p120
      // Predicated region
      $region9: #{tpu_custom_call.1} parent=5 // pred_check
        _
      $region10: #{tpu_custom_call.1} parent=5 // pred_check_branch
        %123 = sbr.rel (%p120) target = $region12
      $region11: #{tpu_custom_call.1} parent=5 // pred_region
        %s124 = ssub.s32 %s16, 1
        // Predicated region
        $region13: #{tpu_custom_call.1} parent=11 // pred_check
          %p125 = pneg %p63
        $region14: #{tpu_custom_call.1} parent=11 // pred_check_branch
          %127 = sbr.rel (%p125) target = $region16
        $region15: #{tpu_custom_call.1} parent=11 // pred_region
          %s129 = ssub.s32 6144, 6144
          %130 = vsyncadd [#allocation6], %s129
          %s131 = sshll.u32 [#allocation5], 4
          %s132 = int_to_ptr.vmem [resolvable:$true] %s131
          %137 = dma.hbm_to_vmem [thread:$0]  %s1, 6144, %s132, [#allocation6], 192, 192, 12
        $region16: #{tpu_custom_call.1} parent=11 // pred_fallthru
          _
        // Predicated region
        $region17: #{tpu_custom_call.1} parent=11 // pred_check
          %p138 = pneg %p84
        $region18: #{tpu_custom_call.1} parent=11 // pred_check_branch
          %140 = sbr.rel (%p138) target = $region20
        $region19: #{tpu_custom_call.1} parent=11 // pred_region
          _
        $region20: #{tpu_custom_call.1} parent=11 // pred_fallthru
          _
      $region12: #{tpu_custom_call.1} parent=5 // pred_fallthru
        _
      %p141 = scmp.lt.s32.totalorder %s16, 2
      // Predicated region
      $region21: #{tpu_custom_call.1} parent=5 // pred_check
        %p142 = pneg %p141
      $region22: #{tpu_custom_call.1} parent=5 // pred_check_branch
        %144 = sbr.rel (%p142) target = $region24
      $region23: #{tpu_custom_call.1} parent=5 // pred_region
        // Predicated region
        $region25: #{tpu_custom_call.1} parent=23 // pred_check
          %p145 = pneg %p36
        $region26: #{tpu_custom_call.1} parent=23 // pred_check_branch
          %147 = sbr.rel (%p145) target = $region28
        $region27: #{tpu_custom_call.1} parent=23 // pred_region
          %s148 = sand.u32 %s26, 1
          %s149 = scalar_lea.sflag [#allocation3], %s148
          %s150 = sand.u32 %s26, 1
          %s151 = smul.addr %s150, 16
          %s152 = scalar_lea.vmem [#allocation2], %s151
          %s153 = smul.u32 4, %s16
          %s155 = ssub.s32 256, 256
          %156 = vsyncadd %s149, %s155
          %s157 = smul.addr %s153, 64
          %s158 = scalar_lea.hbm %s0, %s157
          %s159 = sshll.u32 %s152, 4
          %s160 = int_to_ptr.vmem [resolvable:$true] %s159
          %165 = dma.hbm_to_vmem [thread:$0]  %s158, 256, %s160, %s149, 64, 64, 4
        $region28: #{tpu_custom_call.1} parent=23 // pred_fallthru
          _
      $region24: #{tpu_custom_call.1} parent=5 // pred_fallthru
        _
      %p166 = scmp.le.s32.totalorder 1, %s16
      %p167 = scmp.lt.s32.totalorder %s16, 3
      %p168 = pnand %p166, %p167
      %p169 = pneg %p168
      // Predicated region
      $region29: #{tpu_custom_call.1} parent=5 // pred_check
        _
      $region30: #{tpu_custom_call.1} parent=5 // pred_check_branch
        %171 = sbr.rel (%p168) target = $region32
      $region31: #{tpu_custom_call.1} parent=5 // pred_region
        %s172 = ssub.s32 %s16, 1
        %s173 = sand.u32 %s29, 1
        %s174 = scalar_lea.sflag [#allocation3], %s173
        %s175 = sand.u32 %s29, 1
        %s176 = smul.addr %s175, 16
        %s177 = scalar_lea.vmem [#allocation2], %s176
        // Predicated region
        $region33: #{tpu_custom_call.1} parent=31 // pred_check
          %p178 = pneg %p42
        $region34: #{tpu_custom_call.1} parent=31 // pred_check_branch
          %180 = sbr.rel (%p178) target = $region36
        $region35: #{tpu_custom_call.1} parent=31 // pred_region
          %181 = dma.done %s174, 256
        $region36: #{tpu_custom_call.1} parent=31 // pred_fallthru
          _
        // Predicated region
        $region37: #{tpu_custom_call.1} parent=31 // pred_check
          %p182 = pneg %p63
        $region38: #{tpu_custom_call.1} parent=31 // pred_check_branch
          %184 = sbr.rel (%p182) target = $region40
        $region39: #{tpu_custom_call.1} parent=31 // pred_region
          %185 = dma.done [#allocation6], 6144
        $region40: #{tpu_custom_call.1} parent=31 // pred_fallthru
          _
        %s186 = sand.u32 %s29, 1
        %s187 = scalar_lea.sflag [#allocation3], %s186
        %s188 = sand.u32 %s29, 1
        %s189 = smul.addr %s188, 16
        %s190 = scalar_lea.vmem [#allocation2], %s189
        %p191 = pneg %p42
        %p192 = pneg %p39
        %p193 = pneg %p63
        %p194 = pneg %p60
        %p195 = pneg %p84
        %p196 = pneg %p81
        %p197 = pneg %p110
        %p198 = pneg %p107
        %s199 = sand.u32 %s97, 1
        %s200 = scalar_lea.sflag [#allocation4], %s199
        %s201 = sand.u32 %s97, 1
        %s202 = smul.addr %s201, 32
        %s203 = scalar_lea.vmem [#allocation7], %s202
        %s204 = smul.u32 4, %s21
        %s205 = smul.u32 4, %s21
        %v207 = vld [vmem:[%s177] sm:$0xf]
        %v208 = vld [vmem:[%s177 + $0x4] sm:$0xf]
        %v209 = vld [vmem:[%s177 + $0x8] sm:$0xf]
        %v210 = vld [vmem:[%s177 + $0xc] sm:$0xf]
        %v211 = vld [vmem:[#allocation5] sm:$0xff]
        %v212 = vld [vmem:[#allocation5 + $0x8] sm:$0xf]
        %v213 = vld [vmem:[#allocation5 + $0xc] sm:$0xff]
        %v214 = vld [vmem:[#allocation5 + $0x14] sm:$0xf]
        %v215 = vld [vmem:[#allocation5 + $0x18] sm:$0xff]
        %v216 = vld [vmem:[#allocation5 + $0x20] sm:$0xf]
        %v217 = vld [vmem:[#allocation5 + $0x24] sm:$0xff]
        %v218 = vld [vmem:[#allocation5 + $0x2c] sm:$0xf]
        %v219 = vld [vmem:[#allocation5 + $0x30] sm:$0xff]
        %v220 = vld [vmem:[#allocation5 + $0x38] sm:$0xf]
        %v221 = vld [vmem:[#allocation5 + $0x3c] sm:$0xff]
        %v222 = vld [vmem:[#allocation5 + $0x44] sm:$0xf]
        %v223 = vld [vmem:[#allocation5 + $0x48] sm:$0xff]
        %v224 = vld [vmem:[#allocation5 + $0x50] sm:$0xf]
        %v225 = vld [vmem:[#allocation5 + $0x54] sm:$0xff]
        %v226 = vld [vmem:[#allocation5 + $0x5c] sm:$0xf]
        %v227 = vld [vmem:[#allocation5 + $0x60] sm:$0xff]
        %v228 = vld [vmem:[#allocation5 + $0x68] sm:$0xf]
        %v229 = vld [vmem:[#allocation5 + $0x6c] sm:$0xff]
        %v230 = vld [vmem:[#allocation5 + $0x74] sm:$0xf]
        %v231 = vld [vmem:[#allocation5 + $0x78] sm:$0xff]
        %v232 = vld [vmem:[#allocation5 + $0x80] sm:$0xf]
        %v233 = vld [vmem:[#allocation5 + $0x84] sm:$0xff]
        %v234 = vld [vmem:[#allocation5 + $0x8c] sm:$0xf]
        %v235 = vld [vmem:[#allocation5 + $0x90] sm:$0xff]
        %v236 = vld [vmem:[#allocation5 + $0x98] sm:$0xf]
        %v237 = vld [vmem:[#allocation5 + $0x9c] sm:$0xff]
        %v238 = vld [vmem:[#allocation5 + $0xa4] sm:$0xf]
        %v239 = vld [vmem:[#allocation5 + $0xa8] sm:$0xff]
        %v240 = vld [vmem:[#allocation5 + $0xb0] sm:$0xf]
        %v241 = vld [vmem:[#allocation5 + $0xb4] sm:$0xff]
        %v242 = vld [vmem:[#allocation5 + $0xbc] sm:$0xf]
        %v243 = vld [vmem:[%s2] sm:$0x7]
        %v245 = vlaneseq
        %v246 = vshrl.u32 %v245, 7
        %v247 = vsub.s32 0, %v246
        %v248 = vrot.slane %v243, %v247
        %v249 = vlaneseq
        %v250 = vshrl.u32 %v249, 7
        %v251 = vsub.s32 1, %v250
        %v252 = vrot.slane %v243, %v251
        %v253 = vlaneseq
        %v254 = vshrl.u32 %v253, 7
        %v255 = vsub.s32 2, %v254
        %v256 = vrot.slane %v243, %v255
        %v264 = vunpack.c.l.b16 %v207
        %v265 = vunpack.c.l.b16 %v208
        %v266 = vunpack.c.l.b16 %v209
        %v267 = vunpack.c.l.b16 %v210
        %v268 = vpack.c.b16 %v265, %v264
        %v269 = vpack.c.b16 %v267, %v266
        %v304 = vunpack.c.l.b16 %v211
        %v305 = vunpack.c.h.b16 %v211
        %v306 = vunpack.c.l.b16 %v212
        %v307 = vunpack.c.l.b16 %v213
        %v308 = vunpack.c.h.b16 %v213
        %v309 = vunpack.c.l.b16 %v214
        %v310 = vunpack.c.l.b16 %v215
        %v311 = vunpack.c.h.b16 %v215
        %v312 = vunpack.c.l.b16 %v216
        %v313 = vunpack.c.l.b16 %v217
        %v314 = vunpack.c.h.b16 %v217
        %v315 = vunpack.c.l.b16 %v218
        %v316 = vunpack.c.l.b16 %v219
        %v317 = vunpack.c.h.b16 %v219
        %v318 = vunpack.c.l.b16 %v220
        %v319 = vunpack.c.l.b16 %v221
        %v320 = vunpack.c.h.b16 %v221
        %v321 = vunpack.c.l.b16 %v222
        %v322 = vunpack.c.l.b16 %v223
        %v323 = vunpack.c.h.b16 %v223
        %v324 = vunpack.c.l.b16 %v224
        %v325 = vunpack.c.l.b16 %v225
        %v326 = vunpack.c.h.b16 %v225
        %v327 = vunpack.c.l.b16 %v226
        %v328 = vunpack.c.l.b16 %v227
        %v329 = vunpack.c.h.b16 %v227
        %v330 = vunpack.c.l.b16 %v228
        %v331 = vunpack.c.l.b16 %v229
        %v332 = vunpack.c.h.b16 %v229
        %v333 = vunpack.c.l.b16 %v230
        %v334 = vunpack.c.l.b16 %v231
        %v335 = vunpack.c.h.b16 %v231
        %v336 = vunpack.c.l.b16 %v232
        %v337 = vunpack.c.l.b16 %v233
        %v338 = vunpack.c.h.b16 %v233
        %v339 = vunpack.c.l.b16 %v234
        %v340 = vunpack.c.l.b16 %v235
        %v341 = vunpack.c.h.b16 %v235
        %v342 = vunpack.c.l.b16 %v236
        %v343 = vunpack.c.l.b16 %v237
        %v344 = vunpack.c.h.b16 %v237
        %v345 = vunpack.c.l.b16 %v238
        %v346 = vunpack.c.l.b16 %v239
        %v347 = vunpack.c.h.b16 %v239
        %v348 = vunpack.c.l.b16 %v240
        %v349 = vunpack.c.l.b16 %v241
        %v350 = vunpack.c.h.b16 %v241
        %v351 = vunpack.c.l.b16 %v242
        %v352 = vpack.c.b16 %v307, %v304
        %v353 = vpack.c.b16 %v308, %v305
        %v354 = vpack.c.b16 %v309, %v306
        %v355 = vpack.c.b16 %v313, %v310
        %v356 = vpack.c.b16 %v314, %v311
        %v357 = vpack.c.b16 %v315, %v312
        %v358 = vpack.c.b16 %v319, %v316
        %v359 = vpack.c.b16 %v320, %v317
        %v360 = vpack.c.b16 %v321, %v318
        %v361 = vpack.c.b16 %v325, %v322
        %v362 = vpack.c.b16 %v326, %v323
        %v363 = vpack.c.b16 %v327, %v324
        %v364 = vpack.c.b16 %v331, %v328
        %v365 = vpack.c.b16 %v332, %v329
        %v366 = vpack.c.b16 %v333, %v330
        %v367 = vpack.c.b16 %v337, %v334
        %v368 = vpack.c.b16 %v338, %v335
        %v369 = vpack.c.b16 %v339, %v336
        %v370 = vpack.c.b16 %v343, %v340
        %v371 = vpack.c.b16 %v344, %v341
        %v372 = vpack.c.b16 %v345, %v342
        %v373 = vpack.c.b16 %v349, %v346
        %v374 = vpack.c.b16 %v350, %v347
        %v375 = vpack.c.b16 %v351, %v348
        %400 = vmatprep.subr.bf16.mxu0 %v353
        %401 = vmatpush1.bf16.msra.mxu0 %v352
        %402 = vmatprep.subr.bf16.mxu0 %v356
        %403 = vmatpush1.bf16.msra.mxu0 %v355
        %404 = vmatprep.subr.bf16.mxu0 %v359
        %405 = vmatpush1.bf16.msra.mxu0 %v358
        %406 = vmatprep.subr.bf16.mxu0 %v362
        %407 = vmatpush1.bf16.msra.mxu0 %v361
        %408 = vmatprep.subr.bf16.mxu0 %v365
        %409 = vmatpush1.bf16.msra.mxu0 %v364
        %410 = vmatprep.subr.bf16.mxu0 %v368
        %411 = vmatpush1.bf16.msra.mxu0 %v367
        %412 = vmatprep.subr.bf16.mxu0 %v371
        %413 = vmatpush1.bf16.msra.mxu0 %v370
        %414 = vmatprep.subr.bf16.mxu0 %v374
        %415 = vmatpush1.bf16.msra.mxu0 %v373
        %416 = vmatprep.subr.bf16.mxu0 0
        %417 = vmatpush1.bf16.msra.mxu0 0
        %418 = vmatprep.subr.bf16.mxu0 0
        %419 = vmatpush1.bf16.msra.mxu0 0
        %420 = vmatprep.subr.bf16.mxu0 0
        %421 = vmatpush1.bf16.msra.mxu0 0
        %422 = vmatprep.subr.bf16.mxu0 0
        %423 = vmatpush1.bf16.msra.mxu0 0
        %424 = vmatprep.subr.bf16.mxu0 0
        %425 = vmatpush1.bf16.msra.mxu0 0
        %426 = vmatprep.subr.bf16.mxu0 0
        %427 = vmatpush1.bf16.msra.mxu0 0
        %428 = vmatprep.subr.bf16.mxu0 0
        %429 = vmatpush1.bf16.msra.mxu0 0
        %430 = vmatprep.subr.bf16.mxu0 0
        %431 = vmatpush1.bf16.msra.mxu0 0
        %432 = vmatprep.mubr.bf16.mxu0 0
        %433 = vmatmul.mubr.bf16.gmra.mrb[0].mxu0 %v268
        %v434 = vpop.f32.mrb[0].mxu0
        %v435 = vadd.f32 %v248, %v434
        %v436 = vpop.f32.mrb[0].mxu0
        %v437 = vadd.f32 %v252, %v436
        %v438 = vpop.f32.mrb[0].mxu0
        %v439 = vadd.f32 %v248, %v438
        %v440 = vpop.f32.mrb[0].mxu0
        %v441 = vadd.f32 %v252, %v440
        %442 = vmatprep.mubr.bf16.mxu0 0
        %443 = vmatmul.mubr.bf16.gmra.mrb[0].mxu0 %v269
        %v444 = vpop.f32.mrb[0].mxu0
        %v445 = vadd.f32 %v248, %v444
        %v446 = vpop.f32.mrb[0].mxu0
        %v447 = vadd.f32 %v252, %v446
        %v448 = vpop.f32.mrb[0].mxu0
        %v449 = vadd.f32 %v248, %v448
        %v450 = vpop.f32.mrb[0].mxu0
        %v451 = vadd.f32 %v252, %v450
        %452 = vdwg.mxu0
        %453 = vmatprep.subr.bf16.mxu0 0
        %454 = vmatpush1.bf16.msra.mxu0 %v354
        %455 = vmatprep.subr.bf16.mxu0 0
        %456 = vmatpush1.bf16.msra.mxu0 %v357
        %457 = vmatprep.subr.bf16.mxu0 0
        %458 = vmatpush1.bf16.msra.mxu0 %v360
        %459 = vmatprep.subr.bf16.mxu0 0
        %460 = vmatpush1.bf16.msra.mxu0 %v363
        %461 = vmatprep.subr.bf16.mxu0 0
        %462 = vmatpush1.bf16.msra.mxu0 %v366
        %463 = vmatprep.subr.bf16.mxu0 0
        %464 = vmatpush1.bf16.msra.mxu0 %v369
        %465 = vmatprep.subr.bf16.mxu0 0
        %466 = vmatpush1.bf16.msra.mxu0 %v372
        %467 = vmatprep.subr.bf16.mxu0 0
        %468 = vmatpush1.bf16.msra.mxu0 %v375
        %469 = vmatprep.subr.bf16.mxu0 0
        %470 = vmatpush1.bf16.msra.mxu0 0
        %471 = vmatprep.subr.bf16.mxu0 0
        %472 = vmatpush1.bf16.msra.mxu0 0
        %473 = vmatprep.subr.bf16.mxu0 0
        %474 = vmatpush1.bf16.msra.mxu0 0
        %475 = vmatprep.subr.bf16.mxu0 0
        %476 = vmatpush1.bf16.msra.mxu0 0
        %477 = vmatprep.subr.bf16.mxu0 0
        %478 = vmatpush1.bf16.msra.mxu0 0
        %479 = vmatprep.subr.bf16.mxu0 0
        %480 = vmatpush1.bf16.msra.mxu0 0
        %481 = vmatprep.subr.bf16.mxu0 0
        %482 = vmatpush1.bf16.msra.mxu0 0
        %483 = vmatprep.subr.bf16.mxu0 0
        %484 = vmatpush1.bf16.msra.mxu0 0
        %485 = vmatprep.mubr.bf16.mxu0 0
        %486 = vmatmul.mubr.bf16.gmra.mrb[0].mxu0 %v268
        %v487 = vpop.f32.mrb[0].mxu0
        %v488 = vadd.f32 %v256, %v487
        %v489 = vpop.f32.mrb[0].mxu0
        %v490 = vpop.f32.mrb[0].mxu0
        %v491 = vadd.f32 %v256, %v490
        %v492 = vpop.f32.mrb[0].mxu0
        %493 = vmatprep.mubr.bf16.mxu0 0
        %494 = vmatmul.mubr.bf16.gmra.mrb[0].mxu0 %v269
        %v495 = vpop.f32.mrb[0].mxu0
        %v496 = vadd.f32 %v256, %v495
        %v497 = vpop.f32.mrb[0].mxu0
        %v498 = vpop.f32.mrb[0].mxu0
        %v499 = vadd.f32 %v256, %v498
        %v500 = vpop.f32.mrb[0].mxu0
        %501 = vdwg.mxu0
        %v502 = vmul.f32 %v435, 0.5
        %v503 = vmul.f32 %v439, 0.5
        %v504 = vmul.f32 %v445, 0.5
        %v505 = vmul.f32 %v449, 0.5
        %v506 = vtanh.pop %v502
        %v507 = vtanh.pop %v503
        %v508 = vtanh.pop %v504
        %v509 = vtanh.pop %v505
        %v510 = vadd.f32 %v506, 1.0
        %v511 = vadd.f32 %v507, 1.0
        %v512 = vadd.f32 %v508, 1.0
        %v513 = vadd.f32 %v509, 1.0
        %v514 = vmul.f32 %v510, 0.5
        %v515 = vmul.f32 %v511, 0.5
        %v516 = vmul.f32 %v512, 0.5
        %v517 = vmul.f32 %v513, 0.5
        %v518 = vmax.f32 %v437, 0.0
        %v519 = vmax.f32 %v441, 0.0
        %v520 = vmax.f32 %v447, 0.0
        %v521 = vmax.f32 %v451, 0.0
        %v522 = vsub.f32 %v518, %v488
        %v523 = vsub.f32 %v519, %v491
        %v524 = vsub.f32 %v520, %v496
        %v525 = vsub.f32 %v521, %v499
        %v526 = vmul.f32 %v514, %v522
        %v527 = vmul.f32 %v515, %v523
        %v528 = vmul.f32 %v516, %v524
        %v529 = vmul.f32 %v517, %v525
        %v530 = vadd.f32 %v488, %v526
        %v531 = vadd.f32 %v491, %v527
        %v532 = vadd.f32 %v496, %v528
        %v533 = vadd.f32 %v499, %v529
        %v534 = vpack.c.bf16 %v531, %v530
        %v535 = vpack.c.bf16 %v533, %v532
        %s536 = scalar_lea.vmem [#allocation5], 192
        %v537 = vld [vmem:[%s536] sm:$0xff]
        %v538 = vld [vmem:[%s536 + $0x8] sm:$0xf]
        %v539 = vld [vmem:[%s536 + $0xc] sm:$0xff]
        %v540 = vld [vmem:[%s536 + $0x14] sm:$0xf]
        %v541 = vld [vmem:[%s536 + $0x18] sm:$0xff]
        %v542 = vld [vmem:[%s536 + $0x20] sm:$0xf]
        %v543 = vld [vmem:[%s536 + $0x24] sm:$0xff]
        %v544 = vld [vmem:[%s536 + $0x2c] sm:$0xf]
        %v545 = vld [vmem:[%s536 + $0x30] sm:$0xff]
        %v546 = vld [vmem:[%s536 + $0x38] sm:$0xf]
        %v547 = vld [vmem:[%s536 + $0x3c] sm:$0xff]
        %v548 = vld [vmem:[%s536 + $0x44] sm:$0xf]
        %v549 = vld [vmem:[%s536 + $0x48] sm:$0xff]
        %v550 = vld [vmem:[%s536 + $0x50] sm:$0xf]
        %v551 = vld [vmem:[%s536 + $0x54] sm:$0xff]
        %v552 = vld [vmem:[%s536 + $0x5c] sm:$0xf]
        %v553 = vld [vmem:[%s536 + $0x60] sm:$0xff]
        %v554 = vld [vmem:[%s536 + $0x68] sm:$0xf]
        %v555 = vld [vmem:[%s536 + $0x6c] sm:$0xff]
        %v556 = vld [vmem:[%s536 + $0x74] sm:$0xf]
        %v557 = vld [vmem:[%s536 + $0x78] sm:$0xff]
        %v558 = vld [vmem:[%s536 + $0x80] sm:$0xf]
        %v559 = vld [vmem:[%s536 + $0x84] sm:$0xff]
        %v560 = vld [vmem:[%s536 + $0x8c] sm:$0xf]
        %v561 = vld [vmem:[%s536 + $0x90] sm:$0xff]
        %v562 = vld [vmem:[%s536 + $0x98] sm:$0xf]
        %v563 = vld [vmem:[%s536 + $0x9c] sm:$0xff]
        %v564 = vld [vmem:[%s536 + $0xa4] sm:$0xf]
        %v565 = vld [vmem:[%s536 + $0xa8] sm:$0xff]
        %v566 = vld [vmem:[%s536 + $0xb0] sm:$0xf]
        %v567 = vld [vmem:[%s536 + $0xb4] sm:$0xff]
        %v568 = vld [vmem:[%s536 + $0xbc] sm:$0xf]
        %s569 = scalar_lea.vmem %s2, 3
        %v570 = vld [vmem:[%s569] sm:$0x7]
        %v572 = vlaneseq
        %v573 = vshrl.u32 %v572, 7
        %v574 = vsub.s32 0, %v573
        %v575 = vrot.slane %v570, %v574
        %v576 = vlaneseq
        %v577 = vshrl.u32 %v576, 7
        %v578 = vsub.s32 1, %v577
        %v579 = vrot.slane %v570, %v578
        %v580 = vlaneseq
        %v581 = vshrl.u32 %v580, 7
        %v582 = vsub.s32 2, %v581
        %v583 = vrot.slane %v570, %v582
        %v619 = vunpack.c.l.b16 %v537
        %v620 = vunpack.c.h.b16 %v537
        %v621 = vunpack.c.l.b16 %v538
        %v622 = vunpack.c.l.b16 %v539
        %v623 = vunpack.c.h.b16 %v539
        %v624 = vunpack.c.l.b16 %v540
        %v625 = vunpack.c.l.b16 %v541
        %v626 = vunpack.c.h.b16 %v541
        %v627 = vunpack.c.l.b16 %v542
        %v628 = vunpack.c.l.b16 %v543
        %v629 = vunpack.c.h.b16 %v543
        %v630 = vunpack.c.l.b16 %v544
        %v631 = vunpack.c.l.b16 %v545
        %v632 = vunpack.c.h.b16 %v545
        %v633 = vunpack.c.l.b16 %v546
        %v634 = vunpack.c.l.b16 %v547
        %v635 = vunpack.c.h.b16 %v547
        %v636 = vunpack.c.l.b16 %v548
        %v637 = vunpack.c.l.b16 %v549
        %v638 = vunpack.c.h.b16 %v549
        %v639 = vunpack.c.l.b16 %v550
        %v640 = vunpack.c.l.b16 %v551
        %v641 = vunpack.c.h.b16 %v551
        %v642 = vunpack.c.l.b16 %v552
        %v643 = vunpack.c.l.b16 %v553
        %v644 = vunpack.c.h.b16 %v553
        %v645 = vunpack.c.l.b16 %v554
        %v646 = vunpack.c.l.b16 %v555
        %v647 = vunpack.c.h.b16 %v555
        %v648 = vunpack.c.l.b16 %v556
        %v649 = vunpack.c.l.b16 %v557
        %v650 = vunpack.c.h.b16 %v557
        %v651 = vunpack.c.l.b16 %v558
        %v652 = vunpack.c.l.b16 %v559
        %v653 = vunpack.c.h.b16 %v559
        %v654 = vunpack.c.l.b16 %v560
        %v655 = vunpack.c.l.b16 %v561
        %v656 = vunpack.c.h.b16 %v561
        %v657 = vunpack.c.l.b16 %v562
        %v658 = vunpack.c.l.b16 %v563
        %v659 = vunpack.c.h.b16 %v563
        %v660 = vunpack.c.l.b16 %v564
        %v661 = vunpack.c.l.b16 %v565
        %v662 = vunpack.c.h.b16 %v565
        %v663 = vunpack.c.l.b16 %v566
        %v664 = vunpack.c.l.b16 %v567
        %v665 = vunpack.c.h.b16 %v567
        %v666 = vunpack.c.l.b16 %v568
        %v667 = vpack.c.b16 %v622, %v619
        %v668 = vpack.c.b16 %v623, %v620
        %v669 = vpack.c.b16 %v624, %v621
        %v670 = vpack.c.b16 %v628, %v625
        %v671 = vpack.c.b16 %v629, %v626
        %v672 = vpack.c.b16 %v630, %v627
        %v673 = vpack.c.b16 %v634, %v631
        %v674 = vpack.c.b16 %v635, %v632
        %v675 = vpack.c.b16 %v636, %v633
        %v676 = vpack.c.b16 %v640, %v637
        %v677 = vpack.c.b16 %v641, %v638
        %v678 = vpack.c.b16 %v642, %v639
        %v679 = vpack.c.b16 %v646, %v643
        %v680 = vpack.c.b16 %v647, %v644
        %v681 = vpack.c.b16 %v648, %v645
        %v682 = vpack.c.b16 %v652, %v649
        %v683 = vpack.c.b16 %v653, %v650
        %v684 = vpack.c.b16 %v654, %v651
        %v685 = vpack.c.b16 %v658, %v655
        %v686 = vpack.c.b16 %v659, %v656
        %v687 = vpack.c.b16 %v660, %v657
        %v688 = vpack.c.b16 %v664, %v661
        %v689 = vpack.c.b16 %v665, %v662
        %v690 = vpack.c.b16 %v666, %v663
        %715 = vmatprep.subr.bf16.mxu0 %v668
        %716 = vmatpush1.bf16.msra.mxu0 %v667
        %717 = vmatprep.subr.bf16.mxu0 %v671
        %718 = vmatpush1.bf16.msra.mxu0 %v670
        %719 = vmatprep.subr.bf16.mxu0 %v674
        %720 = vmatpush1.bf16.msra.mxu0 %v673
        %721 = vmatprep.subr.bf16.mxu0 %v677
        %722 = vmatpush1.bf16.msra.mxu0 %v676
        %723 = vmatprep.subr.bf16.mxu0 %v680
        %724 = vmatpush1.bf16.msra.mxu0 %v679
        %725 = vmatprep.subr.bf16.mxu0 %v683
        %726 = vmatpush1.bf16.msra.mxu0 %v682
        %727 = vmatprep.subr.bf16.mxu0 %v686
        %728 = vmatpush1.bf16.msra.mxu0 %v685
        %729 = vmatprep.subr.bf16.mxu0 %v689
        %730 = vmatpush1.bf16.msra.mxu0 %v688
        %731 = vmatprep.subr.bf16.mxu0 0
        %732 = vmatpush1.bf16.msra.mxu0 0
        %733 = vmatprep.subr.bf16.mxu0 0
        %734 = vmatpush1.bf16.msra.mxu0 0
        %735 = vmatprep.subr.bf16.mxu0 0
        %736 = vmatpush1.bf16.msra.mxu0 0
        %737 = vmatprep.subr.bf16.mxu0 0
        %738 = vmatpush1.bf16.msra.mxu0 0
        %739 = vmatprep.subr.bf16.mxu0 0
        %740 = vmatpush1.bf16.msra.mxu0 0
        %741 = vmatprep.subr.bf16.mxu0 0
        %742 = vmatpush1.bf16.msra.mxu0 0
        %743 = vmatprep.subr.bf16.mxu0 0
        %744 = vmatpush1.bf16.msra.mxu0 0
        %745 = vmatprep.subr.bf16.mxu0 0
        %746 = vmatpush1.bf16.msra.mxu0 0
        %747 = vmatprep.mubr.bf16.mxu0 0
        %748 = vmatmul.mubr.bf16.gmra.mrb[0].mxu0 %v534
        %v749 = vpop.f32.mrb[0].mxu0
        %v750 = vadd.f32 %v575, %v749
        %v751 = vpop.f32.mrb[0].mxu0
        %v752 = vadd.f32 %v579, %v751
        %v753 = vpop.f32.mrb[0].mxu0
        %v754 = vadd.f32 %v575, %v753
        %v755 = vpop.f32.mrb[0].mxu0
        %v756 = vadd.f32 %v579, %v755
        %757 = vmatprep.mubr.bf16.mxu0 0
        %758 = vmatmul.mubr.bf16.gmra.mrb[0].mxu0 %v535
        %v759 = vpop.f32.mrb[0].mxu0
        %v760 = vadd.f32 %v575, %v759
        %v761 = vpop.f32.mrb[0].mxu0
        %v762 = vadd.f32 %v579, %v761
        %v763 = vpop.f32.mrb[0].mxu0
        %v764 = vadd.f32 %v575, %v763
        %v765 = vpop.f32.mrb[0].mxu0
        %v766 = vadd.f32 %v579, %v765
        %767 = vdwg.mxu0
        %768 = vmatprep.subr.bf16.mxu0 0
        %769 = vmatpush1.bf16.msra.mxu0 %v669
        %770 = vmatprep.subr.bf16.mxu0 0
        %771 = vmatpush1.bf16.msra.mxu0 %v672
        %772 = vmatprep.subr.bf16.mxu0 0
        %773 = vmatpush1.bf16.msra.mxu0 %v675
        %774 = vmatprep.subr.bf16.mxu0 0
        %775 = vmatpush1.bf16.msra.mxu0 %v678
        %776 = vmatprep.subr.bf16.mxu0 0
        %777 = vmatpush1.bf16.msra.mxu0 %v681
        %778 = vmatprep.subr.bf16.mxu0 0
        %779 = vmatpush1.bf16.msra.mxu0 %v684
        %780 = vmatprep.subr.bf16.mxu0 0
        %781 = vmatpush1.bf16.msra.mxu0 %v687
        %782 = vmatprep.subr.bf16.mxu0 0
        %783 = vmatpush1.bf16.msra.mxu0 %v690
        %784 = vmatprep.subr.bf16.mxu0 0
        %785 = vmatpush1.bf16.msra.mxu0 0
        %786 = vmatprep.subr.bf16.mxu0 0
        %787 = vmatpush1.bf16.msra.mxu0 0
        %788 = vmatprep.subr.bf16.mxu0 0
        %789 = vmatpush1.bf16.msra.mxu0 0
        %790 = vmatprep.subr.bf16.mxu0 0
        %791 = vmatpush1.bf16.msra.mxu0 0
        %792 = vmatprep.subr.bf16.mxu0 0
        %793 = vmatpush1.bf16.msra.mxu0 0
        %794 = vmatprep.subr.bf16.mxu0 0
        %795 = vmatpush1.bf16.msra.mxu0 0
        %796 = vmatprep.subr.bf16.mxu0 0
        %797 = vmatpush1.bf16.msra.mxu0 0
        %798 = vmatprep.subr.bf16.mxu0 0
        %799 = vmatpush1.bf16.msra.mxu0 0
        %800 = vmatprep.mubr.bf16.mxu0 0
        %801 = vmatmul.mubr.bf16.gmra.mrb[0].mxu0 %v534
        %v802 = vpop.f32.mrb[0].mxu0
        %v803 = vadd.f32 %v583, %v802
        %v804 = vpop.f32.mrb[0].mxu0
        %v805 = vpop.f32.mrb[0].mxu0
        %v806 = vadd.f32 %v583, %v805
        %v807 = vpop.f32.mrb[0].mxu0
        %808 = vmatprep.mubr.bf16.mxu0 0
        %809 = vmatmul.mubr.bf16.gmra.mrb[0].mxu0 %v535
        %v810 = vpop.f32.mrb[0].mxu0
        %v811 = vadd.f32 %v583, %v810
        %v812 = vpop.f32.mrb[0].mxu0
        %v813 = vpop.f32.mrb[0].mxu0
        %v814 = vadd.f32 %v583, %v813
        %v815 = vpop.f32.mrb[0].mxu0
        %816 = vdwg.mxu0
        %v817 = vmul.f32 %v750, 0.5
        %v818 = vmul.f32 %v754, 0.5
        %v819 = vmul.f32 %v760, 0.5
        %v820 = vmul.f32 %v764, 0.5
        %v821 = vtanh.pop %v817
        %v822 = vtanh.pop %v818
        %v823 = vtanh.pop %v819
        %v824 = vtanh.pop %v820
        %v825 = vadd.f32 %v821, 1.0
        %v826 = vadd.f32 %v822, 1.0
        %v827 = vadd.f32 %v823, 1.0
        %v828 = vadd.f32 %v824, 1.0
        %v829 = vmul.f32 %v825, 0.5
        %v830 = vmul.f32 %v826, 0.5
        %v831 = vmul.f32 %v827, 0.5
        %v832 = vmul.f32 %v828, 0.5
        %v833 = vmax.f32 %v752, 0.0
        %v834 = vmax.f32 %v756, 0.0
        %v835 = vmax.f32 %v762, 0.0
        %v836 = vmax.f32 %v766, 0.0
        %v837 = vsub.f32 %v833, %v803
        %v838 = vsub.f32 %v834, %v806
        %v839 = vsub.f32 %v835, %v811
        %v840 = vsub.f32 %v836, %v814
        %v841 = vmul.f32 %v829, %v837
        %v842 = vmul.f32 %v830, %v838
        %v843 = vmul.f32 %v831, %v839
        %v844 = vmul.f32 %v832, %v840
        %v845 = vadd.f32 %v803, %v841
        %v846 = vadd.f32 %v806, %v842
        %v847 = vadd.f32 %v811, %v843
        %v848 = vadd.f32 %v814, %v844
        %849 = vst [vmem:[%s203] sm:$0xff] %v845
        %850 = vst [vmem:[%s203 + $0x8] sm:$0xff] %v846
        %851 = vst [vmem:[%s203 + $0x10] sm:$0xff] %v847
        %852 = vst [vmem:[%s203 + $0x18] sm:$0xff] %v848
        %s853 = sand.u32 %s97, 1
        %s854 = scalar_lea.sflag [#allocation4], %s853
        %s855 = sand.u32 %s97, 1
        %s856 = smul.addr %s855, 32
        %s857 = scalar_lea.vmem [#allocation7], %s856
        // Predicated region
        $region41: #{tpu_custom_call.1} parent=31 // pred_check
          %p858 = pneg %p107
        $region42: #{tpu_custom_call.1} parent=31 // pred_check_branch
          %860 = sbr.rel (%p858) target = $region44
        $region43: #{tpu_custom_call.1} parent=31 // pred_region
          %s861 = smul.u32 4, %s21
          %s863 = ssub.s32 512, 512
          %864 = vsyncadd %s854, %s863
          %s865 = smul.addr %s861, 128
          %s866 = scalar_lea.hbm %s3, %s865
          %s867 = sshll.u32 %s857, 4
          %s868 = int_to_ptr.vmem [resolvable:$true] %s867
          %873 = dma.vmem_to_hbm [thread:$0]  %s868, 512, %s866, %s854, 128, 128, 8
        $region44: #{tpu_custom_call.1} parent=31 // pred_fallthru
          _
      $region32: #{tpu_custom_call.1} parent=5 // pred_fallthru
        _
      %p874 = scmp.le.s32.totalorder 2, %s16
      // Predicated region
      $region45: #{tpu_custom_call.1} parent=5 // pred_check
        %p875 = pneg %p874
      $region46: #{tpu_custom_call.1} parent=5 // pred_check_branch
        %877 = sbr.rel (%p875) target = $region48
      $region47: #{tpu_custom_call.1} parent=5 // pred_region
        %s878 = ssub.s32 %s16, 2
        // Predicated region
        $region49: #{tpu_custom_call.1} parent=47 // pred_check
          %p879 = pneg %p113
        $region50: #{tpu_custom_call.1} parent=47 // pred_check_branch
          %881 = sbr.rel (%p879) target = $region52
        $region51: #{tpu_custom_call.1} parent=47 // pred_region
          %s882 = sand.u32 %s98, 1
          %s883 = scalar_lea.sflag [#allocation4], %s882
          %s884 = sand.u32 %s98, 1
          %s885 = smul.addr %s884, 32
          %s886 = scalar_lea.vmem [#allocation7], %s885
          %887 = dma.done %s883, 512
        $region52: #{tpu_custom_call.1} parent=47 // pred_fallthru
          _
      $region48: #{tpu_custom_call.1} parent=5 // pred_fallthru
        _
    $region6: #{tpu_custom_call.1} parent=1 // loop_footer
      %s20 = sadd.s32 1, %s16
    $region7: #{tpu_custom_call.1} parent=1 // loop_footer_branch
      %15 = sbr.rel target = $region3
    $region8: #{tpu_custom_call.1} parent=1 // loop_exit
      _
    %888 = vsyncpa [#allocation3], 1
    %s889 = scalar_lea.sflag [#allocation3], 1
    %890 = vsyncpa %s889, 1
    %891 = vsyncpa [#allocation6], 1
    %892 = vsyncpa [#allocation4], 1
    %s893 = scalar_lea.sflag [#allocation4], 1
    %894 = vsyncpa %s893, 1

</llo_original>
